<compile_context>
chip_gen: v7x
topology: tpu7x:2x2x1
jax: 0.10.0
libtpu: 0.0.40
codegen_flags: <defaults>
</compile_context>

<pallas_src>
import functools

import jax
import jax.numpy as jnp
from jax.experimental import pallas as pl
from jax.experimental.pallas import tpu as pltpu


def _tsp_kernel(diff_ref, x_ref, w1_ref, b1_ref, w2_ref, b2_ref,
                w3_ref, b3_ref, out_ref, hidden_ref, *, n):
    # ---- proj: Linear(E,64) -> ReLU -> (Dropout=id) -> Linear(64,D) -> ReLU ----
    # x/w1 go to the MXU in their stored dtype (bf16 is the native fast path);
    # accumulation is f32 via preferred_element_type.
    h1 = jnp.dot(x_ref[...], w1_ref[...],
                 preferred_element_type=jnp.float32) + b1_ref[...]
    h1 = jnp.maximum(h1, 0.0)
    h2 = jnp.dot(h1, w2_ref[...], preferred_element_type=jnp.float32) + b2_ref[...]
    h2 = jnp.maximum(h2, 0.0)                      # hidden_orig

    # ---- proj_second with residual folded into w3 (w3_eff = w3 + I) ----
    hidden = jnp.dot(h2, w3_ref[...], preferred_element_type=jnp.float32) + b3_ref[...]
    hidden_ref[...] = hidden.astype(hidden_ref.dtype)

    # ---- per-row clamped-window gather via closed-form band mask ----
    # Every column in [diff-n, diff+n] (intersected with [0, D-1]) counts once;
    # clamping piles the out-of-range left/right indices onto columns 0 / D-1,
    # reproducing the repeated clamped-index adds of the reference.
    TB, D = hidden.shape
    diff = jnp.clip(diff_ref[...], 0, D - 1)            # (TB, 1) int32
    col = jax.lax.broadcasted_iota(jnp.int32, (TB, D), 1)

    band = jnp.logical_and(col >= diff - n, col <= diff + n).astype(jnp.int32)
    left_extra = jnp.maximum(n - diff, 0)               # extra hits on col 0
    right_extra = jnp.maximum(n - (D - 1 - diff), 0)    # extra hits on col D-1
    mask_i = (band
              + jnp.where(col == 0, left_extra, 0)
              + jnp.where(col == D - 1, right_extra, 0))
    mask = mask_i.astype(jnp.float32)

    inv_count = jnp.float32(1.0 / (2 * n + 1))
    out = jnp.sum(hidden * mask, axis=1, keepdims=True) * inv_count
    out_ref[...] = jax.nn.sigmoid(out).astype(out_ref.dtype)


def _round_up(v, m):
    return ((v + m - 1) // m) * m


def time_sens_perceptron(x, diff, params, *, n=1, batch_tile=None,
                         compute_dtype=None):
    """x: (B, E), diff: (B,) int32. Returns (out (B,1), hidden (B, n_day)).

    `compute_dtype=jnp.bfloat16` halves the dominant x HBM read and uses the
    MXU's native bf16 path for the first matmul (accumulation stays f32).
    `batch_tile=None` auto-sizes the batch tile (traffic- and VMEM-aware).
    """
    B, E = x.shape
    w1, b1, w2, b2, w3, b3 = params
    H = w1.shape[1]
    D = w2.shape[1]                                  # n_day

    if compute_dtype is not None:
        x = x.astype(compute_dtype)
        w1 = w1.astype(compute_dtype)

    diff2d = diff.astype(jnp.int32).reshape(B, 1)
    # Fold the residual connection into the second projection's weight.
    w3_eff = w3 + jnp.eye(D, dtype=w3.dtype)

    x_bytes = jnp.dtype(x.dtype).itemsize
    w1_bytes = jnp.dtype(w1.dtype).itemsize
    # Per-row HBM traffic of a grid step (x + diff in, out + hidden out).
    row_io_bytes = E * x_bytes + 4 + 4 + D * 4
    # Per-row VMEM footprint: double-buffered I/O blocks plus a rough
    # allowance for the f32 intermediates (h1, h2, hidden, masks).
    row_vmem_bytes = 2 * row_io_bytes + (H + 6 * D) * 4
    weights_bytes = (E * H * w1_bytes + H * 4 + H * D * 4 + D * 4
                     + D * D * 4 + D * 4)

    if batch_tile is None:
        # >= ~2 MiB of traffic per step to amortize per-step pipeline overhead,
        # capped so the per-tile VMEM footprint stays well under ~24 MiB
        # (v7x-safe, and leaves headroom for the compiler).
        tb_traffic = _round_up(max((2 << 20) // row_io_bytes, 8), 8)
        tb_vmem = max(((24 << 20) // row_vmem_bytes) // 8 * 8, 8)
        batch_tile = min(tb_traffic, tb_vmem)

    TB = min(_round_up(batch_tile, 8), _round_up(B, 8))
    # Prefer >= 2 grid steps so the ("parallel",) axis can shard across the two
    # TensorCores on v7x (no effect on single-TC v5e/v6e).
    TB = min(TB, _round_up(pl.cdiv(B, 2), 8))
    TB = max(TB, 8)
    grid = (pl.cdiv(B, TB),)

    # Scoped VMEM: cover the actual footprint (with margin), never past 48 MiB
    # (v7x has only 64 MiB physical per TC).
    vmem_need = TB * row_vmem_bytes + 2 * weights_bytes + (2 << 20)
    vmem_limit = int(min(48 << 20, max(vmem_need, 32 << 20)))

    batch_spec = lambda shape: pl.BlockSpec(shape, lambda i: (i, 0))
    const_spec = lambda shape: pl.BlockSpec(shape, lambda i: (0, 0))

    cost = pl.CostEstimate(
        flops=2 * B * (E * H + H * D + D * D),
        transcendentals=B,                                        # sigmoid
        bytes_accessed=B * row_io_bytes + weights_bytes,
    )

    out, hidden = pl.pallas_call(
        functools.partial(_tsp_kernel, n=n),
        grid=grid,
        in_specs=[
            batch_spec((TB, 1)),        # diff
            batch_spec((TB, E)),        # x
            const_spec((E, H)),         # w1   (VMEM-resident across tiles)
            const_spec((1, H)),         # b1
            const_spec((H, D)),         # w2
            const_spec((1, D)),         # b2
            const_spec((D, D)),         # w3 + I
            const_spec((1, D)),         # b3
        ],
        out_specs=[
            batch_spec((TB, 1)),
            batch_spec((TB, D)),
        ],
        out_shape=[
            jax.ShapeDtypeStruct((B, 1), jnp.float32),
            jax.ShapeDtypeStruct((B, D), jnp.float32),
        ],
        compiler_params=pltpu.CompilerParams(
            dimension_semantics=("parallel",),      # megacore shard on v7x
            vmem_limit_bytes=vmem_limit),
        cost_estimate=cost,
    )(diff2d, x, w1, b1, w2, b2, w3_eff, b3)
    return out, hidden


def _reference(x, diff, params, *, n=1):
    w1, b1, w2, b2, w3, b3 = params
    D = w2.shape[1]
    h1 = jax.nn.relu(x @ w1 + b1)
    h2 = jax.nn.relu(h1 @ w2 + b2)
    hidden = h2 @ w3 + b3 + h2
    B = x.shape[0]
    rows = jnp.arange(B)
    out = hidden[rows, diff]
    for i in range(1, n + 1):
        out = out + hidden[rows, jnp.maximum(diff - i, 0)]
        out = out + hidden[rows, jnp.minimum(diff + i, D - 1)]
    out = jax.nn.sigmoid(out / (2 * n + 1))
    return out.reshape(-1, 1), hidden


if __name__ == "__main__":
    B, E, H, D, N = 64, 32, 64, 8, 1   # batch, embed_dim, hidden(=64 fixed), n_day, n

    key = jax.random.PRNGKey(0)
    k = jax.random.split(key, 8)
    x = jax.random.normal(k[0], (B, E), dtype=jnp.float32)
    diff = jax.random.randint(k[1], (B,), 0, D, dtype=jnp.int32)

    # deterministic synthetic parameters (PyTorch Linear shapes, stored as (in, out))
    w1 = jax.random.normal(k[2], (E, H), dtype=jnp.float32) * 0.1
    b1 = jax.random.normal(k[3], (1, H), dtype=jnp.float32) * 0.1
    w2 = jax.random.normal(k[4], (H, D), dtype=jnp.float32) * 0.1
    b2 = jax.random.normal(k[5], (1, D), dtype=jnp.float32) * 0.1
    w3 = jax.random.normal(k[6], (D, D), dtype=jnp.float32) * 0.1
    b3 = jax.random.normal(k[7], (1, D), dtype=jnp.float32) * 0.1
    params = (w1, b1, w2, b2, w3, b3)

    ref_out, ref_hidden = _reference(x, diff, params, n=N)

    # f32 path: exact-semantics check.
    out, hidden = time_sens_perceptron(x, diff, params, n=N)
    out = jax.block_until_ready(out)
    hidden = jax.block_until_ready(hidden)
    assert out.shape == (B, 1) and hidden.shape == (B, D)
    assert jnp.allclose(out, ref_out, atol=1e-5, rtol=1e-5)
    assert jnp.allclose(hidden, ref_hidden, atol=1e-5, rtol=1e-5)

    # bf16 x/w1 path (MXU native, half the x HBM traffic): loose tolerance.
    out_bf, hidden_bf = time_sens_perceptron(x, diff, params, n=N,
                                             compute_dtype=jnp.bfloat16)
    out_bf = jax.block_until_ready(out_bf)
    hidden_bf = jax.block_until_ready(hidden_bf)
    assert jnp.allclose(out_bf, ref_out, atol=1e-1, rtol=1e-1)
    assert jnp.allclose(hidden_bf, ref_hidden, atol=1e-1, rtol=1e-1)

    print("KERNEL_OK")
</pallas_src>

<mosaic_0001>
module attributes {stable_mosaic.version = 11 : i64} {
  func.func @_tsp_kernel(%arg0: i32, %arg1: memref<32x1xi32, #tpu.memory_space<vmem>>, %arg2: memref<32x32xf32, #tpu.memory_space<vmem>>, %arg3: memref<32x64xf32, #tpu.memory_space<vmem>>, %arg4: memref<1x64xf32, #tpu.memory_space<vmem>>, %arg5: memref<64x8xf32, #tpu.memory_space<vmem>>, %arg6: memref<1x8xf32, #tpu.memory_space<vmem>>, %arg7: memref<8x8xf32, #tpu.memory_space<vmem>>, %arg8: memref<1x8xf32, #tpu.memory_space<vmem>>, %arg9: memref<32x1xf32, #tpu.memory_space<vmem>>, %arg10: memref<32x8xf32, #tpu.memory_space<vmem>>) attributes {dimension_semantics = [#tpu.dimension_semantics<parallel>], iteration_bounds = array<i64: 2>, scalar_prefetch = 0 : i64, scratch_operands = 0 : i64, tpu.core_type = #tpu.core_type<tc>, window_params = [{transform_indices = @transform_0, window_bounds = array<i64: 32, 1>}, {transform_indices = @transform_1, window_bounds = array<i64: 32, 32>}, {pipeline_mode = #tpu.pipeline_mode<synchronous>, transform_indices = @transform_2, window_bounds = array<i64: 32, 64>}, {pipeline_mode = #tpu.pipeline_mode<synchronous>, transform_indices = @transform_3, window_bounds = array<i64: 1, 64>}, {pipeline_mode = #tpu.pipeline_mode<synchronous>, transform_indices = @transform_4, window_bounds = array<i64: 64, 8>}, {pipeline_mode = #tpu.pipeline_mode<synchronous>, transform_indices = @transform_5, window_bounds = array<i64: 1, 8>}, {pipeline_mode = #tpu.pipeline_mode<synchronous>, transform_indices = @transform_6, window_bounds = array<i64: 8, 8>}, {pipeline_mode = #tpu.pipeline_mode<synchronous>, transform_indices = @transform_7, window_bounds = array<i64: 1, 8>}, {transform_indices = @transform_8, window_bounds = array<i64: 32, 1>}, {transform_indices = @transform_9, window_bounds = array<i64: 32, 8>}]} {
    %c0 = arith.constant 0 : index
    %c0_0 = arith.constant 0 : index
    %0 = vector.load %arg2[%c0, %c0_0] : memref<32x32xf32, #tpu.memory_space<vmem>>, vector<32x32xf32>
    %c0_1 = arith.constant 0 : index
    %c0_2 = arith.constant 0 : index
    %1 = vector.load %arg3[%c0_1, %c0_2] : memref<32x64xf32, #tpu.memory_space<vmem>>, vector<32x64xf32>
    %cst = arith.constant dense<0.000000e+00> : vector<32x64xf32>
    %2 = tpu.matmul %0, %1, %cst {dimension_numbers = #tpu.dot_dimension_numbers<[1], [0], [0], [1], [0, 0, 1, 1], [], []>} : vector<32x32xf32>, vector<32x64xf32>, vector<32x64xf32> -> vector<32x64xf32>
    %c0_3 = arith.constant 0 : index
    %c0_4 = arith.constant 0 : index
    %3 = vector.load %arg4[%c0_3, %c0_4] : memref<1x64xf32, #tpu.memory_space<vmem>>, vector<1x64xf32>
    %4 = vector.broadcast %3 : vector<1x64xf32> to vector<32x64xf32>
    %5 = arith.addf %2, %4 : vector<32x64xf32>
    %cst_5 = arith.constant 0.000000e+00 : f32
    %6 = vector.broadcast %cst_5 : f32 to vector<32x64xf32>
    %7 = arith.maximumf %5, %6 : vector<32x64xf32>
    %c0_6 = arith.constant 0 : index
    %c0_7 = arith.constant 0 : index
    %8 = vector.load %arg5[%c0_6, %c0_7] : memref<64x8xf32, #tpu.memory_space<vmem>>, vector<64x8xf32>
    %cst_8 = arith.constant dense<0.000000e+00> : vector<32x8xf32>
    %9 = tpu.matmul %7, %8, %cst_8 {dimension_numbers = #tpu.dot_dimension_numbers<[1], [0], [0], [1], [0, 0, 1, 1], [], []>} : vector<32x64xf32>, vector<64x8xf32>, vector<32x8xf32> -> vector<32x8xf32>
    %c0_9 = arith.constant 0 : index
    %c0_10 = arith.constant 0 : index
    %10 = vector.load %arg6[%c0_9, %c0_10] : memref<1x8xf32, #tpu.memory_space<vmem>>, vector<1x8xf32>
    %11 = vector.broadcast %10 : vector<1x8xf32> to vector<32x8xf32>
    %12 = arith.addf %9, %11 : vector<32x8xf32>
    %cst_11 = arith.constant 0.000000e+00 : f32
    %13 = vector.broadcast %cst_11 : f32 to vector<32x8xf32>
    %14 = arith.maximumf %12, %13 : vector<32x8xf32>
    %c0_12 = arith.constant 0 : index
    %c0_13 = arith.constant 0 : index
    %15 = vector.load %arg7[%c0_12, %c0_13] : memref<8x8xf32, #tpu.memory_space<vmem>>, vector<8x8xf32>
    %cst_14 = arith.constant dense<0.000000e+00> : vector<32x8xf32>
    %16 = tpu.matmul %14, %15, %cst_14 {dimension_numbers = #tpu.dot_dimension_numbers<[1], [0], [0], [1], [0, 0, 1, 1], [], []>} : vector<32x8xf32>, vector<8x8xf32>, vector<32x8xf32> -> vector<32x8xf32>
    %c0_15 = arith.constant 0 : index
    %c0_16 = arith.constant 0 : index
    %17 = vector.load %arg8[%c0_15, %c0_16] : memref<1x8xf32, #tpu.memory_space<vmem>>, vector<1x8xf32>
    %18 = vector.broadcast %17 : vector<1x8xf32> to vector<32x8xf32>
    %19 = arith.addf %16, %18 : vector<32x8xf32>
    %c0_17 = arith.constant 0 : index
    %c0_18 = arith.constant 0 : index
    %20 = vector.load %arg10[%c0_17, %c0_18] : memref<32x8xf32, #tpu.memory_space<vmem>>, vector<32x8xf32>
    tpu.vector_store %arg10[%c0_17, %c0_18], %19 {strides = array<i32>} : memref<32x8xf32, #tpu.memory_space<vmem>>, vector<32x8xf32>,
    %c0_19 = arith.constant 0 : index
    %c0_20 = arith.constant 0 : index
    %21 = vector.load %arg1[%c0_19, %c0_20] : memref<32x1xi32, #tpu.memory_space<vmem>>, vector<32x1xi32>
    %c0_i32 = arith.constant 0 : i32
    %c7_i32 = arith.constant 7 : i32
    %22 = vector.broadcast %c0_i32 : i32 to vector<32x1xi32>
    %23 = arith.maxsi %22, %21 : vector<32x1xi32>
    %24 = vector.broadcast %c7_i32 : i32 to vector<32x1xi32>
    %25 = arith.minsi %24, %23 : vector<32x1xi32>
    %26 = tpu.iota {dimensions = array<i32: 1>} : vector<32x8xi32>
    %c1_i32 = arith.constant 1 : i32
    %27 = vector.broadcast %c1_i32 : i32 to vector<32x1xi32>
    %28 = arith.subi %25, %27 : vector<32x1xi32>
    %29 = vector.broadcast %28 : vector<32x1xi32> to vector<32x8xi32>
    %30 = arith.cmpi sge, %26, %29 : vector<32x8xi32>
    %c1_i32_21 = arith.constant 1 : i32
    %31 = vector.broadcast %c1_i32_21 : i32 to vector<32x1xi32>
    %32 = arith.addi %25, %31 : vector<32x1xi32>
    %33 = vector.broadcast %32 : vector<32x1xi32> to vector<32x8xi32>
    %34 = arith.cmpi sle, %26, %33 : vector<32x8xi32>
    %35 = arith.andi %30, %34 : vector<32x8xi1>
    %36 = arith.extui %35 : vector<32x8xi1> to vector<32x8xi32>
    %c1_i32_22 = arith.constant 1 : i32
    %37 = vector.broadcast %c1_i32_22 : i32 to vector<32x1xi32>
    %38 = arith.subi %37, %25 : vector<32x1xi32>
    %c0_i32_23 = arith.constant 0 : i32
    %39 = vector.broadcast %c0_i32_23 : i32 to vector<32x1xi32>
    %40 = arith.maxsi %38, %39 : vector<32x1xi32>
    %c7_i32_24 = arith.constant 7 : i32
    %41 = vector.broadcast %c7_i32_24 : i32 to vector<32x1xi32>
    %42 = arith.subi %41, %25 : vector<32x1xi32>
    %c1_i32_25 = arith.constant 1 : i32
    %43 = vector.broadcast %c1_i32_25 : i32 to vector<32x1xi32>
    %44 = arith.subi %43, %42 : vector<32x1xi32>
    %c0_i32_26 = arith.constant 0 : i32
    %45 = vector.broadcast %c0_i32_26 : i32 to vector<32x1xi32>
    %46 = arith.maxsi %44, %45 : vector<32x1xi32>
    %c0_i32_27 = arith.constant 0 : i32
    %47 = vector.broadcast %c0_i32_27 : i32 to vector<32x8xi32>
    %48 = arith.cmpi eq, %26, %47 : vector<32x8xi32>
    %c0_i32_28 = arith.constant 0 : i32
    %49 = vector.shape_cast %40 : vector<32x1xi32> to vector<32x1xi32>
    %50 = vector.broadcast %49 : vector<32x1xi32> to vector<32x8xi32>
    %51 = vector.broadcast %c0_i32_28 : i32 to vector<32x8xi32>
    %52 = arith.select %48, %50, %51 : vector<32x8xi1>, vector<32x8xi32>
    %53 = arith.addi %36, %52 : vector<32x8xi32>
    %c7_i32_29 = arith.constant 7 : i32
    %54 = vector.broadcast %c7_i32_29 : i32 to vector<32x8xi32>
    %55 = arith.cmpi eq, %26, %54 : vector<32x8xi32>
    %c0_i32_30 = arith.constant 0 : i32
    %56 = vector.shape_cast %46 : vector<32x1xi32> to vector<32x1xi32>
    %57 = vector.broadcast %56 : vector<32x1xi32> to vector<32x8xi32>
    %58 = vector.broadcast %c0_i32_30 : i32 to vector<32x8xi32>
    %59 = arith.select %55, %57, %58 : vector<32x8xi1>, vector<32x8xi32>
    %60 = arith.addi %53, %59 : vector<32x8xi32>
    %61 = arith.sitofp %60 : vector<32x8xi32> to vector<32x8xf32>
    %62 = arith.mulf %19, %61 : vector<32x8xf32>
    %cst_31 = arith.constant dense<0.000000e+00> : vector<32xf32>
    %63 = vector.multi_reduction <add>, %62, %cst_31 [1] : vector<32x8xf32> to vector<32xf32>
    %64 = vector.shape_cast %63 : vector<32xf32> to vector<32x1xf32>
    %cst_32 = arith.constant 0.333333343 : f32
    %65 = vector.broadcast %cst_32 : f32 to vector<32x1xf32>
    %66 = arith.mulf %64, %65 : vector<32x1xf32>
    %67 = arith.negf %66 : vector<32x1xf32>
    %68 = math.exp %67 : vector<32x1xf32>
    %cst_33 = arith.constant 1.000000e+00 : f32
    %69 = vector.broadcast %cst_33 : f32 to vector<32x1xf32>
    %70 = arith.addf %69, %68 : vector<32x1xf32>
    %71 = arith.divf %69, %70 : vector<32x1xf32>
    %c0_34 = arith.constant 0 : index
    %c0_35 = arith.constant 0 : index
    %72 = vector.load %arg9[%c0_34, %c0_35] : memref<32x1xf32, #tpu.memory_space<vmem>>, vector<32x1xf32>
    tpu.vector_store %arg9[%c0_34, %c0_35], %71 {strides = array<i32>} : memref<32x1xf32, #tpu.memory_space<vmem>>, vector<32x1xf32>,
    return
  }
  func.func @transform_0(%arg0: i32) -> (i32, i32) {
    %c0_i32 = arith.constant 0 : i32
    %c0_i32_0 = arith.constant 0 : i32
    return %arg0, %c0_i32 : i32, i32
  }
  func.func @transform_1(%arg0: i32) -> (i32, i32) {
    %c0_i32 = arith.constant 0 : i32
    %c0_i32_0 = arith.constant 0 : i32
    return %arg0, %c0_i32 : i32, i32
  }
  func.func @transform_2(%arg0: i32) -> (i32, i32) {
    %c0_i32 = arith.constant 0 : i32
    %c0_i32_0 = arith.constant 0 : i32
    %c0_i32_1 = arith.constant 0 : i32
    return %c0_i32, %c0_i32_0 : i32, i32
  }
  func.func @transform_3(%arg0: i32) -> (i32, i32) {
    %c0_i32 = arith.constant 0 : i32
    %c0_i32_0 = arith.constant 0 : i32
    %c0_i32_1 = arith.constant 0 : i32
    return %c0_i32, %c0_i32_0 : i32, i32
  }
  func.func @transform_4(%arg0: i32) -> (i32, i32) {
    %c0_i32 = arith.constant 0 : i32
    %c0_i32_0 = arith.constant 0 : i32
    %c0_i32_1 = arith.constant 0 : i32
    return %c0_i32, %c0_i32_0 : i32, i32
  }
  func.func @transform_5(%arg0: i32) -> (i32, i32) {
    %c0_i32 = arith.constant 0 : i32
    %c0_i32_0 = arith.constant 0 : i32
    %c0_i32_1 = arith.constant 0 : i32
    return %c0_i32, %c0_i32_0 : i32, i32
  }
  func.func @transform_6(%arg0: i32) -> (i32, i32) {
    %c0_i32 = arith.constant 0 : i32
    %c0_i32_0 = arith.constant 0 : i32
    %c0_i32_1 = arith.constant 0 : i32
    return %c0_i32, %c0_i32_0 : i32, i32
  }
  func.func @transform_7(%arg0: i32) -> (i32, i32) {
    %c0_i32 = arith.constant 0 : i32
    %c0_i32_0 = arith.constant 0 : i32
    %c0_i32_1 = arith.constant 0 : i32
    return %c0_i32, %c0_i32_0 : i32, i32
  }
  func.func @transform_8(%arg0: i32) -> (i32, i32) {
    %c0_i32 = arith.constant 0 : i32
    %c0_i32_0 = arith.constant 0 : i32
    return %arg0, %c0_i32 : i32, i32
  }
  func.func @transform_9(%arg0: i32) -> (i32, i32) {
    %c0_i32 = arith.constant 0 : i32
    %c0_i32_0 = arith.constant 0 : i32
    return %arg0, %c0_i32 : i32, i32
  }
}

</mosaic_0001>

<llo_original>
// kernel: tpu_custom_call.1
$region0: #{tpu_custom_call.1}
  #allocation0 [shape = 'u32[]', space=smem, size = 0x4, offset = 0x4, fixed_abs, tag = 'smem constant byte address 0x4 - core index']
  #allocation1 [shape = 'u32[144,128]{1,0:T(1,128)}', space=vmem, size = 0x12000, scoped, tag = 'internal scratch']
  %s0 = inlined_call_operand.vmem [shape: s32[64,1], index: 0, kind: input, shape index: {}]
  %s1 = inlined_call_operand.vmem [shape: f32[64,32], index: 1, kind: input, shape index: {}]
  %s2 = inlined_call_operand.vmem [shape: f32[32,64], index: 2, kind: input, shape index: {}]
  %s3 = inlined_call_operand.vmem [shape: f32[1,64], index: 3, kind: input, shape index: {}]
  %s4 = inlined_call_operand.vmem [shape: f32[64,8], index: 4, kind: input, shape index: {}]
  %s5 = inlined_call_operand.vmem [shape: f32[1,8], index: 5, kind: input, shape index: {}]
  %s6 = inlined_call_operand.vmem [shape: f32[8,8], index: 6, kind: input, shape index: {}]
  %s7 = inlined_call_operand.vmem [shape: f32[1,8], index: 7, kind: input, shape index: {}]
  %s8 = inlined_call_operand.vmem [shape: f32[64,1], index: 8, kind: output, shape index: {0}]
  %s9 = inlined_call_operand.vmem [shape: f32[64,8], index: 9, kind: output, shape index: {1}]
  %10 = xla_tuple %s8, %s9
  %s11 = sld [smem:[#allocation0]]
  $region73: #{tpu_custom_call.1} parent=0
    _
  %s13 = ssub.s32 1, %s11
  %s14 = scalar_select 0, %s13, %s11
  loop: start=0, step=1, limit=4
  $region2: #{tpu_custom_call.1} parent=0 // loop_pre_header
    _
  $region3: #{tpu_custom_call.1} parent=0 // loop_header
    %s16 = sphi 0, %s20
    %p17 = scmp.ge.s32.totalorder %s16, 4
    %s26 = sphi 0, %s28
    %s29 = sphi 0, %s26
    %s30 = sphi 0, %s29
    %s46 = sphi 0, %s30
    %s52 = sphi 0, %s54
    %s55 = sphi 0, %s52
    %s56 = sphi 0, %s55
    %s72 = sphi 0, %s56
    %s76 = sphi 0, %s76
    %s78 = sphi 0, %s76
    %s79 = sphi 0, %s78
    %s93 = sphi 0, %s79
    %s97 = sphi 0, %s97
    %s99 = sphi 0, %s97
    %s100 = sphi 0, %s99
    %s114 = sphi 0, %s100
    %s118 = sphi 0, %s118
    %s120 = sphi 0, %s118
    %s121 = sphi 0, %s120
    %s135 = sphi 0, %s121
    %s139 = sphi 0, %s139
    %s141 = sphi 0, %s139
    %s142 = sphi 0, %s141
    %s156 = sphi 0, %s142
    %s160 = sphi 0, %s160
    %s162 = sphi 0, %s160
    %s163 = sphi 0, %s162
    %s177 = sphi 0, %s163
    %s181 = sphi 0, %s181
    %s183 = sphi 0, %s181
    %s184 = sphi 0, %s183
    %s198 = sphi 0, %s184
    %s204 = sphi 0, %s206
    %s207 = sphi 0, %s204
    %s208 = sphi 0, %s207
    %s224 = sphi 0, %s208
    %s230 = sphi 0, %s232
    %s233 = sphi 0, %s230
    %s234 = sphi 0, %s233
    %s250 = sphi 0, %s234
  $region4: #{tpu_custom_call.1} parent=0 // loop_header_branch
    %19 = sbr.rel (%p17) target = $region8
  $region5: #{tpu_custom_call.1} parent=0 // loop_body
    %s21 = ssub.s32 %s16, 1
    %s22 = ssub.s32 %s16, 2
    %s23 = sadd.s32 %s16, 1
    %s24 = ssub.s32 %s16, %s23
    %p25 = scmp.eq.s32.totalorder %s24, 0
    %s27 = sadd.s32 %s26, 1
    %s28 = scalar_select %p25, %s26, %s27
    %p31 = pneg %p25
    %p32 = scmp.eq.s32.totalorder %s16, 1
    %p33 = por %p31, %p32
    %p34 = scmp.ne.s32.totalorder %s26, %s29
    %p35 = scmp.eq.s32.totalorder %s16, 0
    %p36 = por %p34, %p35
    %p37 = scmp.ne.s32.totalorder %s26, %s29
    %p38 = scmp.eq.s32.totalorder %s21, 1
    %p39 = por %p37, %p38
    %p40 = scmp.ne.s32.totalorder %s29, %s30
    %p41 = scmp.eq.s32.totalorder %s21, 0
    %p42 = por %p40, %p41
    %p43 = scmp.ne.s32.totalorder %s29, %s30
    %p44 = scmp.eq.s32.totalorder %s22, 1
    %p45 = por %p43, %p44
    %p47 = scmp.ne.s32.totalorder %s30, %s46
    %p48 = scmp.eq.s32.totalorder %s22, 0
    %p49 = por %p47, %p48
    %s50 = ssub.s32 %s16, %s23
    %p51 = scmp.eq.s32.totalorder %s50, 0
    %s53 = sadd.s32 %s52, 1
    %s54 = scalar_select %p51, %s52, %s53
    %p57 = pneg %p51
    %p58 = scmp.eq.s32.totalorder %s16, 1
    %p59 = por %p57, %p58
    %p60 = scmp.ne.s32.totalorder %s52, %s55
    %p61 = scmp.eq.s32.totalorder %s16, 0
    %p62 = por %p60, %p61
    %p63 = scmp.ne.s32.totalorder %s52, %s55
    %p64 = scmp.eq.s32.totalorder %s21, 1
    %p65 = por %p63, %p64
    %p66 = scmp.ne.s32.totalorder %s55, %s56
    %p67 = scmp.eq.s32.totalorder %s21, 0
    %p68 = por %p66, %p67
    %p69 = scmp.ne.s32.totalorder %s55, %s56
    %p70 = scmp.eq.s32.totalorder %s22, 1
    %p71 = por %p69, %p70
    %p73 = scmp.ne.s32.totalorder %s56, %s72
    %p74 = scmp.eq.s32.totalorder %s22, 0
    %p75 = por %p73, %p74
    %s77 = sadd.s32 %s76, 1
    %p80 = scmp.eq.s32.totalorder %s16, 1
    %p81 = scmp.ne.s32.totalorder %s76, %s78
    %p82 = scmp.eq.s32.totalorder %s16, 0
    %p83 = por %p81, %p82
    %p84 = scmp.ne.s32.totalorder %s76, %s78
    %p85 = scmp.eq.s32.totalorder %s21, 1
    %p86 = por %p84, %p85
    %p87 = scmp.ne.s32.totalorder %s78, %s79
    %p88 = scmp.eq.s32.totalorder %s21, 0
    %p89 = por %p87, %p88
    %p90 = scmp.ne.s32.totalorder %s78, %s79
    %p91 = scmp.eq.s32.totalorder %s22, 1
    %p92 = por %p90, %p91
    %p94 = scmp.ne.s32.totalorder %s79, %s93
    %p95 = scmp.eq.s32.totalorder %s22, 0
    %p96 = por %p94, %p95
    %s98 = sadd.s32 %s97, 1
    %p101 = scmp.eq.s32.totalorder %s16, 1
    %p102 = scmp.ne.s32.totalorder %s97, %s99
    %p103 = scmp.eq.s32.totalorder %s16, 0
    %p104 = por %p102, %p103
    %p105 = scmp.ne.s32.totalorder %s97, %s99
    %p106 = scmp.eq.s32.totalorder %s21, 1
    %p107 = por %p105, %p106
    %p108 = scmp.ne.s32.totalorder %s99, %s100
    %p109 = scmp.eq.s32.totalorder %s21, 0
    %p110 = por %p108, %p109
    %p111 = scmp.ne.s32.totalorder %s99, %s100
    %p112 = scmp.eq.s32.totalorder %s22, 1
    %p113 = por %p111, %p112
    %p115 = scmp.ne.s32.totalorder %s100, %s114
    %p116 = scmp.eq.s32.totalorder %s22, 0
    %p117 = por %p115, %p116
    %s119 = sadd.s32 %s118, 1
    %p122 = scmp.eq.s32.totalorder %s16, 1
    %p123 = scmp.ne.s32.totalorder %s118, %s120
    %p124 = scmp.eq.s32.totalorder %s16, 0
    %p125 = por %p123, %p124
    %p126 = scmp.ne.s32.totalorder %s118, %s120
    %p127 = scmp.eq.s32.totalorder %s21, 1
    %p128 = por %p126, %p127
    %p129 = scmp.ne.s32.totalorder %s120, %s121
    %p130 = scmp.eq.s32.totalorder %s21, 0
    %p131 = por %p129, %p130
    %p132 = scmp.ne.s32.totalorder %s120, %s121
    %p133 = scmp.eq.s32.totalorder %s22, 1
    %p134 = por %p132, %p133
    %p136 = scmp.ne.s32.totalorder %s121, %s135
    %p137 = scmp.eq.s32.totalorder %s22, 0
    %p138 = por %p136, %p137
    %s140 = sadd.s32 %s139, 1
    %p143 = scmp.eq.s32.totalorder %s16, 1
    %p144 = scmp.ne.s32.totalorder %s139, %s141
    %p145 = scmp.eq.s32.totalorder %s16, 0
    %p146 = por %p144, %p145
    %p147 = scmp.ne.s32.totalorder %s139, %s141
    %p148 = scmp.eq.s32.totalorder %s21, 1
    %p149 = por %p147, %p148
    %p150 = scmp.ne.s32.totalorder %s141, %s142
    %p151 = scmp.eq.s32.totalorder %s21, 0
    %p152 = por %p150, %p151
    %p153 = scmp.ne.s32.totalorder %s141, %s142
    %p154 = scmp.eq.s32.totalorder %s22, 1
    %p155 = por %p153, %p154
    %p157 = scmp.ne.s32.totalorder %s142, %s156
    %p158 = scmp.eq.s32.totalorder %s22, 0
    %p159 = por %p157, %p158
    %s161 = sadd.s32 %s160, 1
    %p164 = scmp.eq.s32.totalorder %s16, 1
    %p165 = scmp.ne.s32.totalorder %s160, %s162
    %p166 = scmp.eq.s32.totalorder %s16, 0
    %p167 = por %p165, %p166
    %p168 = scmp.ne.s32.totalorder %s160, %s162
    %p169 = scmp.eq.s32.totalorder %s21, 1
    %p170 = por %p168, %p169
    %p171 = scmp.ne.s32.totalorder %s162, %s163
    %p172 = scmp.eq.s32.totalorder %s21, 0
    %p173 = por %p171, %p172
    %p174 = scmp.ne.s32.totalorder %s162, %s163
    %p175 = scmp.eq.s32.totalorder %s22, 1
    %p176 = por %p174, %p175
    %p178 = scmp.ne.s32.totalorder %s163, %s177
    %p179 = scmp.eq.s32.totalorder %s22, 0
    %p180 = por %p178, %p179
    %s182 = sadd.s32 %s181, 1
    %p185 = scmp.eq.s32.totalorder %s16, 1
    %p186 = scmp.ne.s32.totalorder %s181, %s183
    %p187 = scmp.eq.s32.totalorder %s16, 0
    %p188 = por %p186, %p187
    %p189 = scmp.ne.s32.totalorder %s181, %s183
    %p190 = scmp.eq.s32.totalorder %s21, 1
    %p191 = por %p189, %p190
    %p192 = scmp.ne.s32.totalorder %s183, %s184
    %p193 = scmp.eq.s32.totalorder %s21, 0
    %p194 = por %p192, %p193
    %p195 = scmp.ne.s32.totalorder %s183, %s184
    %p196 = scmp.eq.s32.totalorder %s22, 1
    %p197 = por %p195, %p196
    %p199 = scmp.ne.s32.totalorder %s184, %s198
    %p200 = scmp.eq.s32.totalorder %s22, 0
    %p201 = por %p199, %p200
    %s202 = ssub.s32 %s16, %s23
    %p203 = scmp.eq.s32.totalorder %s202, 0
    %s205 = sadd.s32 %s204, 1
    %s206 = scalar_select %p203, %s204, %s205
    %p209 = pneg %p203
    %p210 = scmp.eq.s32.totalorder %s16, 1
    %p211 = por %p209, %p210
    %p212 = scmp.ne.s32.totalorder %s204, %s207
    %p213 = scmp.eq.s32.totalorder %s16, 0
    %p214 = por %p212, %p213
    %p215 = scmp.ne.s32.totalorder %s204, %s207
    %p216 = scmp.eq.s32.totalorder %s21, 1
    %p217 = por %p215, %p216
    %p218 = scmp.ne.s32.totalorder %s207, %s208
    %p219 = scmp.eq.s32.totalorder %s21, 0
    %p220 = por %p218, %p219
    %p221 = scmp.ne.s32.totalorder %s207, %s208
    %p222 = scmp.eq.s32.totalorder %s22, 1
    %p223 = por %p221, %p222
    %p225 = scmp.ne.s32.totalorder %s208, %s224
    %p226 = scmp.eq.s32.totalorder %s22, 0
    %p227 = por %p225, %p226
    %s228 = ssub.s32 %s16, %s23
    %p229 = scmp.eq.s32.totalorder %s228, 0
    %s231 = sadd.s32 %s230, 1
    %s232 = scalar_select %p229, %s230, %s231
    %p235 = pneg %p229
    %p236 = scmp.eq.s32.totalorder %s16, 1
    %p237 = por %p235, %p236
    %p238 = scmp.ne.s32.totalorder %s230, %s233
    %p239 = scmp.eq.s32.totalorder %s16, 0
    %p240 = por %p238, %p239
    %p241 = scmp.ne.s32.totalorder %s230, %s233
    %p242 = scmp.eq.s32.totalorder %s21, 1
    %p243 = por %p241, %p242
    %p244 = scmp.ne.s32.totalorder %s233, %s234
    %p245 = scmp.eq.s32.totalorder %s21, 0
    %p246 = por %p244, %p245
    %p247 = scmp.ne.s32.totalorder %s233, %s234
    %p248 = scmp.eq.s32.totalorder %s22, 1
    %p249 = por %p247, %p248
    %p251 = scmp.ne.s32.totalorder %s234, %s250
    %p252 = scmp.eq.s32.totalorder %s22, 0
    %p253 = por %p251, %p252
    %p254 = scmp.le.s32.totalorder 1, %s16
    %p255 = scmp.lt.s32.totalorder %s16, 3
    %p256 = pnand %p254, %p255
    %p257 = pneg %p256
    // Predicated region
    $region9: #{tpu_custom_call.1} parent=5 // pred_check
      _
    $region10: #{tpu_custom_call.1} parent=5 // pred_check_branch
      %259 = sbr.rel (%p256) target = $region12
    $region11: #{tpu_custom_call.1} parent=5 // pred_region
      %s260 = ssub.s32 %s16, 1
      // Predicated region
      $region13: #{tpu_custom_call.1} parent=11 // pred_check
        %p261 = pneg %p89
      $region14: #{tpu_custom_call.1} parent=11 // pred_check_branch
        %263 = sbr.rel (%p261) target = $region16
      $region15: #{tpu_custom_call.1} parent=11 // pred_region
        _
      $region16: #{tpu_custom_call.1} parent=11 // pred_fallthru
        _
      // Predicated region
      $region17: #{tpu_custom_call.1} parent=11 // pred_check
        %p264 = pneg %p110
      $region18: #{tpu_custom_call.1} parent=11 // pred_check_branch
        %266 = sbr.rel (%p264) target = $region20
      $region19: #{tpu_custom_call.1} parent=11 // pred_region
        _
      $region20: #{tpu_custom_call.1} parent=11 // pred_fallthru
        _
      // Predicated region
      $region21: #{tpu_custom_call.1} parent=11 // pred_check
        %p267 = pneg %p131
      $region22: #{tpu_custom_call.1} parent=11 // pred_check_branch
        %269 = sbr.rel (%p267) target = $region24
      $region23: #{tpu_custom_call.1} parent=11 // pred_region
        _
      $region24: #{tpu_custom_call.1} parent=11 // pred_fallthru
        _
      // Predicated region
      $region25: #{tpu_custom_call.1} parent=11 // pred_check
        %p270 = pneg %p152
      $region26: #{tpu_custom_call.1} parent=11 // pred_check_branch
        %272 = sbr.rel (%p270) target = $region28
      $region27: #{tpu_custom_call.1} parent=11 // pred_region
        _
      $region28: #{tpu_custom_call.1} parent=11 // pred_fallthru
        _
      // Predicated region
      $region29: #{tpu_custom_call.1} parent=11 // pred_check
        %p273 = pneg %p173
      $region30: #{tpu_custom_call.1} parent=11 // pred_check_branch
        %275 = sbr.rel (%p273) target = $region32
      $region31: #{tpu_custom_call.1} parent=11 // pred_region
        _
      $region32: #{tpu_custom_call.1} parent=11 // pred_fallthru
        _
      // Predicated region
      $region33: #{tpu_custom_call.1} parent=11 // pred_check
        %p276 = pneg %p194
      $region34: #{tpu_custom_call.1} parent=11 // pred_check_branch
        %278 = sbr.rel (%p276) target = $region36
      $region35: #{tpu_custom_call.1} parent=11 // pred_region
        _
      $region36: #{tpu_custom_call.1} parent=11 // pred_fallthru
        _
    $region12: #{tpu_custom_call.1} parent=5 // pred_fallthru
      _
    %p279 = scmp.lt.s32.totalorder %s16, 2
    // Predicated region
    $region37: #{tpu_custom_call.1} parent=5 // pred_check
      %p280 = pneg %p279
    $region38: #{tpu_custom_call.1} parent=5 // pred_check_branch
      %282 = sbr.rel (%p280) target = $region40
    $region39: #{tpu_custom_call.1} parent=5 // pred_region
      // Predicated region
      $region41: #{tpu_custom_call.1} parent=39 // pred_check
        %p283 = pneg %p36
      $region42: #{tpu_custom_call.1} parent=39 // pred_check_branch
        %285 = sbr.rel (%p283) target = $region44
      $region43: #{tpu_custom_call.1} parent=39 // pred_region
        %s286 = smul.u32 4, %s16
        %p287 = scmp.lt.s32.totalorder %s286, 7
        %s288 = scalar_select %p287, %s286, 7
        %s289 = smul.addr %s288, 8
        %s290 = scalar_lea.vmem %s0, %s289
        %s291 = smul.u32 4, %s16
      $region44: #{tpu_custom_call.1} parent=39 // pred_fallthru
        _
      // Predicated region
      $region45: #{tpu_custom_call.1} parent=39 // pred_check
        %p292 = pneg %p62
      $region46: #{tpu_custom_call.1} parent=39 // pred_check_branch
        %294 = sbr.rel (%p292) target = $region48
      $region47: #{tpu_custom_call.1} parent=39 // pred_region
        %s295 = smul.u32 4, %s16
        %p296 = scmp.lt.s32.totalorder %s295, 7
        %s297 = scalar_select %p296, %s295, 7
        %s298 = smul.addr %s297, 8
        %s299 = scalar_lea.vmem %s1, %s298
        %s300 = smul.u32 4, %s16
      $region48: #{tpu_custom_call.1} parent=39 // pred_fallthru
        _
    $region40: #{tpu_custom_call.1} parent=5 // pred_fallthru
      _
    %p301 = scmp.le.s32.totalorder 1, %s16
    %p302 = scmp.lt.s32.totalorder %s16, 3
    %p303 = pnand %p301, %p302
    %p304 = pneg %p303
    // Predicated region
    $region49: #{tpu_custom_call.1} parent=5 // pred_check
      _
    $region50: #{tpu_custom_call.1} parent=5 // pred_check_branch
      %306 = sbr.rel (%p303) target = $region52
    $region51: #{tpu_custom_call.1} parent=5 // pred_region
      %s307 = ssub.s32 %s16, 1
      %s308 = smul.u32 4, %s21
      %p309 = scmp.lt.s32.totalorder %s308, 7
      %s310 = scalar_select %p309, %s308, 7
      %s311 = smul.addr %s310, 8
      %s312 = scalar_lea.vmem %s0, %s311
      %p313 = pneg %p42
      %p314 = pneg %p39
      %s315 = smul.u32 4, %s21
      %p316 = scmp.lt.s32.totalorder %s315, 7
      %s317 = scalar_select %p316, %s315, 7
      %s318 = smul.addr %s317, 8
      %s319 = scalar_lea.vmem %s1, %s318
      %p320 = pneg %p68
      %p321 = pneg %p65
      %p322 = pneg %p89
      %p323 = pneg %p86
      %p324 = pneg %p110
      %p325 = pneg %p107
      %p326 = pneg %p131
      %p327 = pneg %p128
      %p328 = pneg %p152
      %p329 = pneg %p149
      %p330 = pneg %p173
      %p331 = pneg %p170
      %p332 = pneg %p194
      %p333 = pneg %p191
      %p334 = pneg %p220
      %p335 = pneg %p217
      %s336 = smul.u32 4, %s21
      %p337 = scmp.lt.s32.totalorder %s336, 7
      %s338 = scalar_select %p337, %s336, 7
      %s339 = smul.addr %s338, 8
      %s340 = scalar_lea.vmem %s8, %s339
      %p341 = pneg %p246
      %p342 = pneg %p243
      %s343 = smul.u32 4, %s21
      %p344 = scmp.lt.s32.totalorder %s343, 7
      %s345 = scalar_select %p344, %s343, 7
      %s346 = smul.addr %s345, 8
      %s347 = scalar_lea.vmem %s9, %s346
      %s348 = smul.u32 4, %s21
      %p349 = scmp.lt.s32.totalorder %s348, 7
      %s350 = scalar_select %p349, %s348, 7
      %s351 = smul.addr %s350, 8
      %s352 = scalar_lea.vmem %s0, %s351
      %s353 = smul.u32 4, %s21
      %s354 = smul.u32 4, %s21
      %p355 = scmp.lt.s32.totalorder %s354, 7
      %s356 = scalar_select %p355, %s354, 7
      %s357 = smul.addr %s356, 8
      %s358 = scalar_lea.vmem %s1, %s357
      %s359 = smul.u32 4, %s21
      %s360 = smul.u32 4, %s21
      %p361 = scmp.lt.s32.totalorder %s360, 7
      %s362 = scalar_select %p361, %s360, 7
      %s363 = smul.addr %s362, 8
      %s364 = scalar_lea.vmem %s8, %s363
      %s365 = smul.u32 4, %s21
      %s366 = smul.u32 4, %s21
      %p367 = scmp.lt.s32.totalorder %s366, 7
      %s368 = scalar_select %p367, %s366, 7
      %s369 = smul.addr %s368, 8
      %s370 = scalar_lea.vmem %s9, %s369
      %s371 = smul.u32 4, %s21
      %v372 = vld [vmem:[%s358] sm:$0xff]
      %v373 = vld [vmem:[%s358 + $0x8] sm:$0xff]
      %v374 = vld [vmem:[%s358 + $0x10] sm:$0xff]
      %v375 = vld [vmem:[%s358 + $0x18] sm:$0xff]
      %v376 = vld [vmem:[%s2] sm:$0xff]
      %v377 = vld [vmem:[%s2 + $0x8] sm:$0xff]
      %v378 = vld [vmem:[%s2 + $0x10] sm:$0xff]
      %v379 = vld [vmem:[%s2 + $0x18] sm:$0xff]
      %v380 = vld [vmem:[%s3] sm:$0x1]
      %v382 = vlaneseq
      %v383 = vshrl.u32 %v382, 7
      %v384 = vsub.s32 0, %v383
      %v385 = vrot.slane %v380, %v384
      %vm387 = vcmask 261120
      %v389 = vsel %vm387, %v372, 0
      %v392 = vsel %vm387, %v373, 0
      %v395 = vsel %vm387, %v374, 0
      %v398 = vsel %vm387, %v375, 0
      %400 = vmatprep.subr.mxu0 0.0
      %401 = vmatpush1.msra.mxu0 %v376
      %402 = vmatprep.subr.mxu0 0.0
      %403 = vmatpush1.msra.mxu0 %v377
      %404 = vmatprep.subr.mxu0 0.0
      %405 = vmatpush1.msra.mxu0 %v378
      %406 = vmatprep.subr.mxu0 0.0
      %407 = vmatpush1.msra.mxu0 %v379
      %408 = vmatprep.subr.mxu0 0.0
      %409 = vmatpush1.msra.mxu0 0.0
      %410 = vmatprep.subr.mxu0 0.0
      %411 = vmatpush1.msra.mxu0 0.0
      %412 = vmatprep.subr.mxu0 0.0
      %413 = vmatpush1.msra.mxu0 0.0
      %414 = vmatprep.subr.mxu0 0.0
      %415 = vmatpush1.msra.mxu0 0.0
      %416 = vmatprep.subr.mxu0 0.0
      %417 = vmatpush1.msra.mxu0 0.0
      %418 = vmatprep.subr.mxu0 0.0
      %419 = vmatpush1.msra.mxu0 0.0
      %420 = vmatprep.subr.mxu0 0.0
      %421 = vmatpush1.msra.mxu0 0.0
      %422 = vmatprep.subr.mxu0 0.0
      %423 = vmatpush1.msra.mxu0 0.0
      %424 = vmatprep.subr.mxu0 0.0
      %425 = vmatpush1.msra.mxu0 0.0
      %426 = vmatprep.subr.mxu0 0.0
      %427 = vmatpush1.msra.mxu0 0.0
      %428 = vmatprep.subr.mxu0 0.0
      %429 = vmatpush1.msra.mxu0 0.0
      %430 = vmatprep.subr.mxu0 0.0
      %431 = vmatpush1.msra.mxu0 0.0
      %432 = vmatprep.subr.mxu0 0.0
      %433 = vmatpush1.msra.mxu0 0.0
      %434 = vmatprep.subr.mxu0 0.0
      %435 = vmatpush1.msra.mxu0 0.0
      %436 = vmatprep.subr.mxu0 0.0
      %437 = vmatpush1.msra.mxu0 0.0
      %438 = vmatprep.subr.mxu0 0.0
      %439 = vmatpush1.msra.mxu0 0.0
      %440 = vmatprep.subr.mxu0 0.0
      %441 = vmatpush1.msra.mxu0 0.0
      %442 = vmatprep.subr.mxu0 0.0
      %443 = vmatpush1.msra.mxu0 0.0
      %444 = vmatprep.subr.mxu0 0.0
      %445 = vmatpush1.msra.mxu0 0.0
      %446 = vmatprep.subr.mxu0 0.0
      %447 = vmatpush1.msra.mxu0 0.0
      %448 = vmatprep.subr.mxu0 0.0
      %449 = vmatpush1.msra.mxu0 0.0
      %450 = vmatprep.subr.mxu0 0.0
      %451 = vmatpush1.msra.mxu0 0.0
      %452 = vmatprep.subr.mxu0 0.0
      %453 = vmatpush1.msra.mxu0 0.0
      %454 = vmatprep.subr.mxu0 0.0
      %455 = vmatpush1.msra.mxu0 0.0
      %456 = vmatprep.subr.mxu0 0.0
      %457 = vmatpush1.msra.mxu0 0.0
      %458 = vmatprep.subr.mxu0 0.0
      %459 = vmatpush1.msra.mxu0 0.0
      %460 = vmatprep.subr.mxu0 0.0
      %461 = vmatpush1.msra.mxu0 0.0
      %462 = vmatprep.subr.mxu0 0.0
      %463 = vmatpush1.msra.mxu0 0.0
      %464 = vmatprep.mubr.f32.mxu0 0.0
      %465 = vmatmul.mubr.f32.gmra.mrb[0].mxu0 %v389
      %v466 = vpop.f32.mrb[0].mxu0
      %v467 = vadd.f32 %v385, %v466
      %v468 = vpop.f32.mrb[0].mxu0
      %469 = vmatprep.mubr.f32.mxu0 0.0
      %470 = vmatmul.mubr.f32.gmra.mrb[0].mxu0 %v392
      %v471 = vpop.f32.mrb[0].mxu0
      %v472 = vadd.f32 %v385, %v471
      %v473 = vpop.f32.mrb[0].mxu0
      %474 = vmatprep.mubr.f32.mxu0 0.0
      %475 = vmatmul.mubr.f32.gmra.mrb[0].mxu0 %v395
      %v476 = vpop.f32.mrb[0].mxu0
      %v477 = vadd.f32 %v385, %v476
      %v478 = vpop.f32.mrb[0].mxu0
      %479 = vmatprep.mubr.f32.mxu0 0.0
      %480 = vmatmul.mubr.f32.gmra.mrb[0].mxu0 %v398
      %v481 = vpop.f32.mrb[0].mxu0
      %v482 = vadd.f32 %v385, %v481
      %v483 = vpop.f32.mrb[0].mxu0
      %484 = vdwg.mxu0
      %v485 = vmax.f32 %v467, 0.0
      %v486 = vmax.f32 %v472, 0.0
      %v487 = vmax.f32 %v477, 0.0
      %v488 = vmax.f32 %v482, 0.0
      %v489 = vld [vmem:[%s4] sm:$0xff]
      %v490 = vld [vmem:[%s4 + $0x8] sm:$0xff]
      %v491 = vld [vmem:[%s4 + $0x10] sm:$0xff]
      %v492 = vld [vmem:[%s4 + $0x18] sm:$0xff]
      %v493 = vld [vmem:[%s4 + $0x20] sm:$0xff]
      %v494 = vld [vmem:[%s4 + $0x28] sm:$0xff]
      %v495 = vld [vmem:[%s4 + $0x30] sm:$0xff]
      %v496 = vld [vmem:[%s4 + $0x38] sm:$0xff]
      %v497 = vld [vmem:[%s5] sm:$0x1]
      %v499 = vlaneseq
      %v500 = vshrl.u32 %v499, 7
      %v501 = vsub.s32 0, %v500
      %v502 = vrot.slane %v497, %v501
      %vm504 = vcmask 523264
      %v506 = vsel %vm504, %v485, 0
      %v509 = vsel %vm504, %v486, 0
      %v512 = vsel %vm504, %v487, 0
      %v515 = vsel %vm504, %v488, 0
      %517 = vmatprep.subr.mxu0 0.0
      %518 = vmatpush1.msra.mxu0 %v489
      %519 = vmatprep.subr.mxu0 0.0
      %520 = vmatpush1.msra.mxu0 %v490
      %521 = vmatprep.subr.mxu0 0.0
      %522 = vmatpush1.msra.mxu0 %v491
      %523 = vmatprep.subr.mxu0 0.0
      %524 = vmatpush1.msra.mxu0 %v492
      %525 = vmatprep.subr.mxu0 0.0
      %526 = vmatpush1.msra.mxu0 %v493
      %527 = vmatprep.subr.mxu0 0.0
      %528 = vmatpush1.msra.mxu0 %v494
      %529 = vmatprep.subr.mxu0 0.0
      %530 = vmatpush1.msra.mxu0 %v495
      %531 = vmatprep.subr.mxu0 0.0
      %532 = vmatpush1.msra.mxu0 %v496
      %533 = vmatprep.subr.mxu0 0.0
      %534 = vmatpush1.msra.mxu0 0.0
      %535 = vmatprep.subr.mxu0 0.0
      %536 = vmatpush1.msra.mxu0 0.0
      %537 = vmatprep.subr.mxu0 0.0
      %538 = vmatpush1.msra.mxu0 0.0
      %539 = vmatprep.subr.mxu0 0.0
      %540 = vmatpush1.msra.mxu0 0.0
      %541 = vmatprep.subr.mxu0 0.0
      %542 = vmatpush1.msra.mxu0 0.0
      %543 = vmatprep.subr.mxu0 0.0
      %544 = vmatpush1.msra.mxu0 0.0
      %545 = vmatprep.subr.mxu0 0.0
      %546 = vmatpush1.msra.mxu0 0.0
      %547 = vmatprep.subr.mxu0 0.0
      %548 = vmatpush1.msra.mxu0 0.0
      %549 = vmatprep.subr.mxu0 0.0
      %550 = vmatpush1.msra.mxu0 0.0
      %551 = vmatprep.subr.mxu0 0.0
      %552 = vmatpush1.msra.mxu0 0.0
      %553 = vmatprep.subr.mxu0 0.0
      %554 = vmatpush1.msra.mxu0 0.0
      %555 = vmatprep.subr.mxu0 0.0
      %556 = vmatpush1.msra.mxu0 0.0
      %557 = vmatprep.subr.mxu0 0.0
      %558 = vmatpush1.msra.mxu0 0.0
      %559 = vmatprep.subr.mxu0 0.0
      %560 = vmatpush1.msra.mxu0 0.0
      %561 = vmatprep.subr.mxu0 0.0
      %562 = vmatpush1.msra.mxu0 0.0
      %563 = vmatprep.subr.mxu0 0.0
      %564 = vmatpush1.msra.mxu0 0.0
      %565 = vmatprep.subr.mxu0 0.0
      %566 = vmatpush1.msra.mxu0 0.0
      %567 = vmatprep.subr.mxu0 0.0
      %568 = vmatpush1.msra.mxu0 0.0
      %569 = vmatprep.subr.mxu0 0.0
      %570 = vmatpush1.msra.mxu0 0.0
      %571 = vmatprep.subr.mxu0 0.0
      %572 = vmatpush1.msra.mxu0 0.0
      %573 = vmatprep.subr.mxu0 0.0
      %574 = vmatpush1.msra.mxu0 0.0
      %575 = vmatprep.subr.mxu0 0.0
      %576 = vmatpush1.msra.mxu0 0.0
      %577 = vmatprep.subr.mxu0 0.0
      %578 = vmatpush1.msra.mxu0 0.0
      %579 = vmatprep.subr.mxu0 0.0
      %580 = vmatpush1.msra.mxu0 0.0
      %581 = vmatprep.mubr.f32.mxu0 0.0
      %582 = vmatmul.mubr.f32.gmra.mrb[0].mxu0 %v506
      %v583 = vpop.f32.mrb[0].mxu0
      %v584 = vadd.f32 %v502, %v583
      %v585 = vpop.f32.mrb[0].mxu0
      %586 = vmatprep.mubr.f32.mxu0 0.0
      %587 = vmatmul.mubr.f32.gmra.mrb[0].mxu0 %v509
      %v588 = vpop.f32.mrb[0].mxu0
      %v589 = vadd.f32 %v502, %v588
      %v590 = vpop.f32.mrb[0].mxu0
      %591 = vmatprep.mubr.f32.mxu0 0.0
      %592 = vmatmul.mubr.f32.gmra.mrb[0].mxu0 %v512
      %v593 = vpop.f32.mrb[0].mxu0
      %v594 = vadd.f32 %v502, %v593
      %v595 = vpop.f32.mrb[0].mxu0
      %596 = vmatprep.mubr.f32.mxu0 0.0
      %597 = vmatmul.mubr.f32.gmra.mrb[0].mxu0 %v515
      %v598 = vpop.f32.mrb[0].mxu0
      %v599 = vadd.f32 %v502, %v598
      %v600 = vpop.f32.mrb[0].mxu0
      %601 = vdwg.mxu0
      %v602 = vmax.f32 %v584, 0.0
      %v603 = vmax.f32 %v589, 0.0
      %v604 = vmax.f32 %v594, 0.0
      %v605 = vmax.f32 %v599, 0.0
      %v606 = vld [vmem:[%s6] sm:$0xff]
      %v607 = vld [vmem:[%s7] sm:$0x1]
      %v609 = vlaneseq
      %v610 = vshrl.u32 %v609, 7
      %v611 = vsub.s32 0, %v610
      %v612 = vrot.slane %v607, %v611
      %vm614 = vcmask 64512
      %v616 = vsel %vm614, %v602, 0
      %v619 = vsel %vm614, %v603, 0
      %v622 = vsel %vm614, %v604, 0
      %v625 = vsel %vm614, %v605, 0
      %627 = vmatprep.subr.mxu0 0.0
      %628 = vmatpush1.msra.mxu0 %v606
      %629 = vmatprep.subr.mxu0 0.0
      %630 = vmatpush1.msra.mxu0 0.0
      %631 = vmatprep.subr.mxu0 0.0
      %632 = vmatpush1.msra.mxu0 0.0
      %633 = vmatprep.subr.mxu0 0.0
      %634 = vmatpush1.msra.mxu0 0.0
      %635 = vmatprep.subr.mxu0 0.0
      %636 = vmatpush1.msra.mxu0 0.0
      %637 = vmatprep.subr.mxu0 0.0
      %638 = vmatpush1.msra.mxu0 0.0
      %639 = vmatprep.subr.mxu0 0.0
      %640 = vmatpush1.msra.mxu0 0.0
      %641 = vmatprep.subr.mxu0 0.0
      %642 = vmatpush1.msra.mxu0 0.0
      %643 = vmatprep.subr.mxu0 0.0
      %644 = vmatpush1.msra.mxu0 0.0
      %645 = vmatprep.subr.mxu0 0.0
      %646 = vmatpush1.msra.mxu0 0.0
      %647 = vmatprep.subr.mxu0 0.0
      %648 = vmatpush1.msra.mxu0 0.0
      %649 = vmatprep.subr.mxu0 0.0
      %650 = vmatpush1.msra.mxu0 0.0
      %651 = vmatprep.subr.mxu0 0.0
      %652 = vmatpush1.msra.mxu0 0.0
      %653 = vmatprep.subr.mxu0 0.0
      %654 = vmatpush1.msra.mxu0 0.0
      %655 = vmatprep.subr.mxu0 0.0
      %656 = vmatpush1.msra.mxu0 0.0
      %657 = vmatprep.subr.mxu0 0.0
      %658 = vmatpush1.msra.mxu0 0.0
      %659 = vmatprep.subr.mxu0 0.0
      %660 = vmatpush1.msra.mxu0 0.0
      %661 = vmatprep.subr.mxu0 0.0
      %662 = vmatpush1.msra.mxu0 0.0
      %663 = vmatprep.subr.mxu0 0.0
      %664 = vmatpush1.msra.mxu0 0.0
      %665 = vmatprep.subr.mxu0 0.0
      %666 = vmatpush1.msra.mxu0 0.0
      %667 = vmatprep.subr.mxu0 0.0
      %668 = vmatpush1.msra.mxu0 0.0
      %669 = vmatprep.subr.mxu0 0.0
      %670 = vmatpush1.msra.mxu0 0.0
      %671 = vmatprep.subr.mxu0 0.0
      %672 = vmatpush1.msra.mxu0 0.0
      %673 = vmatprep.subr.mxu0 0.0
      %674 = vmatpush1.msra.mxu0 0.0
      %675 = vmatprep.subr.mxu0 0.0
      %676 = vmatpush1.msra.mxu0 0.0
      %677 = vmatprep.subr.mxu0 0.0
      %678 = vmatpush1.msra.mxu0 0.0
      %679 = vmatprep.subr.mxu0 0.0
      %680 = vmatpush1.msra.mxu0 0.0
      %681 = vmatprep.subr.mxu0 0.0
      %682 = vmatpush1.msra.mxu0 0.0
      %683 = vmatprep.subr.mxu0 0.0
      %684 = vmatpush1.msra.mxu0 0.0
      %685 = vmatprep.subr.mxu0 0.0
      %686 = vmatpush1.msra.mxu0 0.0
      %687 = vmatprep.subr.mxu0 0.0
      %688 = vmatpush1.msra.mxu0 0.0
      %689 = vmatprep.subr.mxu0 0.0
      %690 = vmatpush1.msra.mxu0 0.0
      %691 = vmatprep.mubr.f32.mxu0 0.0
      %692 = vmatmul.mubr.f32.gmra.mrb[0].mxu0 %v616
      %v693 = vpop.f32.mrb[0].mxu0
      %v694 = vadd.f32 %v612, %v693
      %v695 = vpop.f32.mrb[0].mxu0
      %696 = vmatprep.mubr.f32.mxu0 0.0
      %697 = vmatmul.mubr.f32.gmra.mrb[0].mxu0 %v619
      %v698 = vpop.f32.mrb[0].mxu0
      %v699 = vadd.f32 %v612, %v698
      %v700 = vpop.f32.mrb[0].mxu0
      %701 = vmatprep.mubr.f32.mxu0 0.0
      %702 = vmatmul.mubr.f32.gmra.mrb[0].mxu0 %v622
      %v703 = vpop.f32.mrb[0].mxu0
      %v704 = vadd.f32 %v612, %v703
      %v705 = vpop.f32.mrb[0].mxu0
      %706 = vmatprep.mubr.f32.mxu0 0.0
      %707 = vmatmul.mubr.f32.gmra.mrb[0].mxu0 %v625
      %v708 = vpop.f32.mrb[0].mxu0
      %v709 = vadd.f32 %v612, %v708
      %v710 = vpop.f32.mrb[0].mxu0
      %711 = vdwg.mxu0
      %712 = vst.msk [vmem:[%s370] sm:$0xff] %vm614, %v694
      %713 = vst.msk [vmem:[%s370 + $0x8] sm:$0xff] %vm614, %v699
      %714 = vst.msk [vmem:[%s370 + $0x10] sm:$0xff] %vm614, %v704
      %715 = vst.msk [vmem:[%s370 + $0x18] sm:$0xff] %vm614, %v709
      %v716 = vld [vmem:[%s352] sm:$0xff]
      %v717 = vld [vmem:[%s352 + $0x8] sm:$0xff]
      %v718 = vld [vmem:[%s352 + $0x10] sm:$0xff]
      %v719 = vld [vmem:[%s352 + $0x18] sm:$0xff]
      %vm720 = vcmp.gt.s32.totalorder %v716, 0
      %v721 = vsel %vm720, %v716, 0
      %vm722 = vcmp.gt.s32.totalorder %v717, 0
      %v723 = vsel %vm722, %v717, 0
      %vm724 = vcmp.gt.s32.totalorder %v718, 0
      %v725 = vsel %vm724, %v718, 0
      %vm726 = vcmp.gt.s32.totalorder %v719, 0
      %v727 = vsel %vm726, %v719, 0
      %vm728 = vcmp.lt.s32.totalorder %v721, 7
      %v729 = vsel %vm728, %v721, 7
      %vm730 = vcmp.lt.s32.totalorder %v723, 7
      %v731 = vsel %vm730, %v723, 7
      %vm732 = vcmp.lt.s32.totalorder %v725, 7
      %v733 = vsel %vm732, %v725, 7
      %vm734 = vcmp.lt.s32.totalorder %v727, 7
      %v735 = vsel %vm734, %v727, 7
      %v736 = vlaneseq
      %v737 = vand.u32 %v736, 127
      %v738 = vsub.s32 %v729, 1
      %v739 = vsub.s32 %v731, 1
      %v740 = vsub.s32 %v733, 1
      %v741 = vsub.s32 %v735, 1
      %742 = vset.pattern.permute.xlu0 0
      %743 = vperm.xlu0 %742, %v738
      %v744 = vpop.permute.xlu0 %743
      %745 = vset.pattern.permute.xlu0 0
      %746 = vperm.xlu0 %745, %v739
      %v747 = vpop.permute.xlu0 %746
      %748 = vset.pattern.permute.xlu0 0
      %749 = vperm.xlu0 %748, %v740
      %v750 = vpop.permute.xlu0 %749
      %751 = vset.pattern.permute.xlu0 0
      %752 = vperm.xlu0 %751, %v741
      %v753 = vpop.permute.xlu0 %752
      %vm754 = vcmp.ge.s32.totalorder %v737, %v744
      %vm755 = vcmp.ge.s32.totalorder %v737, %v747
      %vm756 = vcmp.ge.s32.totalorder %v737, %v750
      %vm757 = vcmp.ge.s32.totalorder %v737, %v753
      %v758 = vadd.s32 %v729, 1
      %v759 = vadd.s32 %v731, 1
      %v760 = vadd.s32 %v733, 1
      %v761 = vadd.s32 %v735, 1
      %762 = vset.pattern.permute.xlu0 0
      %763 = vperm.xlu0 %762, %v758
      %v764 = vpop.permute.xlu0 %763
      %765 = vset.pattern.permute.xlu0 0
      %766 = vperm.xlu0 %765, %v759
      %v767 = vpop.permute.xlu0 %766
      %768 = vset.pattern.permute.xlu0 0
      %769 = vperm.xlu0 %768, %v760
      %v770 = vpop.permute.xlu0 %769
      %771 = vset.pattern.permute.xlu0 0
      %772 = vperm.xlu0 %771, %v761
      %v773 = vpop.permute.xlu0 %772
      %vm774 = vcmp.le.s32.totalorder %v737, %v764
      %vm775 = vcmp.le.s32.totalorder %v737, %v767
      %vm776 = vcmp.le.s32.totalorder %v737, %v770
      %vm777 = vcmp.le.s32.totalorder %v737, %v773
      %vm778 = vmand %vm754, %vm774
      %vm779 = vmand %vm755, %vm775
      %vm780 = vmand %vm756, %vm776
      %vm781 = vmand %vm757, %vm777
      %v782 = vsel %vm778, 1, 0
      %v783 = vsel %vm779, 1, 0
      %v784 = vsel %vm780, 1, 0
      %v785 = vsel %vm781, 1, 0
      %v786 = vsub.s32 1, %v729
      %v787 = vsub.s32 1, %v731
      %v788 = vsub.s32 1, %v733
      %v789 = vsub.s32 1, %v735
      %vm790 = vcmp.gt.s32.totalorder %v786, 0
      %v791 = vsel %vm790, %v786, 0
      %vm792 = vcmp.gt.s32.totalorder %v787, 0
      %v793 = vsel %vm792, %v787, 0
      %vm794 = vcmp.gt.s32.totalorder %v788, 0
      %v795 = vsel %vm794, %v788, 0
      %vm796 = vcmp.gt.s32.totalorder %v789, 0
      %v797 = vsel %vm796, %v789, 0
      %v798 = vsub.s32 7, %v729
      %v799 = vsub.s32 7, %v731
      %v800 = vsub.s32 7, %v733
      %v801 = vsub.s32 7, %v735
      %v802 = vsub.s32 1, %v798
      %v803 = vsub.s32 1, %v799
      %v804 = vsub.s32 1, %v800
      %v805 = vsub.s32 1, %v801
      %vm806 = vcmp.gt.s32.totalorder %v802, 0
      %v807 = vsel %vm806, %v802, 0
      %vm808 = vcmp.gt.s32.totalorder %v803, 0
      %v809 = vsel %vm808, %v803, 0
      %vm810 = vcmp.gt.s32.totalorder %v804, 0
      %v811 = vsel %vm810, %v804, 0
      %vm812 = vcmp.gt.s32.totalorder %v805, 0
      %v813 = vsel %vm812, %v805, 0
      %vm814 = vcmp.eq.s32.totalorder %v737, 0
      %815 = vset.pattern.permute.xlu0 0
      %816 = vperm.xlu0 %815, %v791
      %v817 = vpop.permute.xlu0 %816
      %818 = vset.pattern.permute.xlu0 0
      %819 = vperm.xlu0 %818, %v793
      %v820 = vpop.permute.xlu0 %819
      %821 = vset.pattern.permute.xlu0 0
      %822 = vperm.xlu0 %821, %v795
      %v823 = vpop.permute.xlu0 %822
      %824 = vset.pattern.permute.xlu0 0
      %825 = vperm.xlu0 %824, %v797
      %v826 = vpop.permute.xlu0 %825
      %v827 = vsel %vm814, %v817, 0
      %v828 = vsel %vm814, %v820, 0
      %v829 = vsel %vm814, %v823, 0
      %v830 = vsel %vm814, %v826, 0
      %v831 = vadd.s32 %v782, %v827
      %v832 = vadd.s32 %v783, %v828
      %v833 = vadd.s32 %v784, %v829
      %v834 = vadd.s32 %v785, %v830
      %vm835 = vcmp.eq.s32.totalorder %v737, 7
      %836 = vset.pattern.permute.xlu0 0
      %837 = vperm.xlu0 %836, %v807
      %v838 = vpop.permute.xlu0 %837
      %839 = vset.pattern.permute.xlu0 0
      %840 = vperm.xlu0 %839, %v809
      %v841 = vpop.permute.xlu0 %840
      %842 = vset.pattern.permute.xlu0 0
      %843 = vperm.xlu0 %842, %v811
      %v844 = vpop.permute.xlu0 %843
      %845 = vset.pattern.permute.xlu0 0
      %846 = vperm.xlu0 %845, %v813
      %v847 = vpop.permute.xlu0 %846
      %v848 = vsel %vm835, %v838, 0
      %v849 = vsel %vm835, %v841, 0
      %v850 = vsel %vm835, %v844, 0
      %v851 = vsel %vm835, %v847, 0
      %v852 = vadd.s32 %v831, %v848
      %v853 = vadd.s32 %v832, %v849
      %v854 = vadd.s32 %v833, %v850
      %v855 = vadd.s32 %v834, %v851
      %v856 = vcvt.s32.f32 %v852
      %v857 = vcvt.s32.f32 %v853
      %v858 = vcvt.s32.f32 %v854
      %v859 = vcvt.s32.f32 %v855
      %v860 = vmul.f32 %v694, %v856
      %v861 = vmul.f32 %v699, %v857
      %v862 = vmul.f32 %v704, %v858
      %v863 = vmul.f32 %v709, %v859
      %v864 = vsel %vm614, %v860, 0.0
      %865 = vadd.xlane.f32.xlu0 %v864
      %v866 = vpop.xlane.xlu0 %865
      %v867 = vsel %vm614, %v861, 0.0
      %868 = vadd.xlane.f32.xlu0 %v867
      %v869 = vpop.xlane.xlu0 %868
      %v870 = vsel %vm614, %v862, 0.0
      %871 = vadd.xlane.f32.xlu0 %v870
      %v872 = vpop.xlane.xlu0 %871
      %v873 = vsel %vm614, %v863, 0.0
      %874 = vadd.xlane.f32.xlu0 %v873
      %v875 = vpop.xlane.xlu0 %874
      %v876 = vmul.f32 %v866, 0.33333334
      %v877 = vmul.f32 %v869, 0.33333334
      %v878 = vmul.f32 %v872, 0.33333334
      %v879 = vmul.f32 %v875, 0.33333334
      %v880 = vxor.u32 %v876, 2147483648
      %v881 = vxor.u32 %v877, 2147483648
      %v882 = vxor.u32 %v878, 2147483648
      %v883 = vxor.u32 %v879, 2147483648
      %v884 = vmul.f32 %v880, 1.442695
      %v885 = vpow.pop %v884
      %v886 = vmul.f32 %v881, 1.442695
      %v887 = vpow.pop %v886
      %v888 = vmul.f32 %v882, 1.442695
      %v889 = vpow.pop %v888
      %v890 = vmul.f32 %v883, 1.442695
      %v891 = vpow.pop %v890
      %v892 = vadd.f32 %v885, 1.0
      %v893 = vadd.f32 %v887, 1.0
      %v894 = vadd.f32 %v889, 1.0
      %v895 = vadd.f32 %v891, 1.0
      %v896 = vrcp.pop %v892
      %v897 = vmul.f32 1.0, %v896
      %v898 = vrcp.pop %v893
      %v899 = vmul.f32 1.0, %v898
      %v900 = vrcp.pop %v894
      %v901 = vmul.f32 1.0, %v900
      %v902 = vrcp.pop %v895
      %v903 = vmul.f32 1.0, %v902
      %vm904 = vcmask 7168
      %905 = vst.msk [vmem:[%s364] sm:$0xff] %vm904, %v897
      %906 = vst.msk [vmem:[%s364 + $0x8] sm:$0xff] %vm904, %v899
      %907 = vst.msk [vmem:[%s364 + $0x10] sm:$0xff] %vm904, %v901
      %908 = vst.msk [vmem:[%s364 + $0x18] sm:$0xff] %vm904, %v903
      %s909 = smul.u32 4, %s21
      %p910 = scmp.lt.s32.totalorder %s909, 7
      %s911 = scalar_select %p910, %s909, 7
      %s912 = smul.addr %s911, 8
      %s913 = scalar_lea.vmem %s8, %s912
      %s914 = smul.u32 4, %s21
      %p915 = scmp.lt.s32.totalorder %s914, 7
      %s916 = scalar_select %p915, %s914, 7
      %s917 = smul.addr %s916, 8
      %s918 = scalar_lea.vmem %s9, %s917
      // Predicated region
      $region53: #{tpu_custom_call.1} parent=51 // pred_check
        %p919 = pneg %p217
      $region54: #{tpu_custom_call.1} parent=51 // pred_check_branch
        %921 = sbr.rel (%p919) target = $region56
      $region55: #{tpu_custom_call.1} parent=51 // pred_region
        %s922 = smul.u32 4, %s21
      $region56: #{tpu_custom_call.1} parent=51 // pred_fallthru
        _
      // Predicated region
      $region57: #{tpu_custom_call.1} parent=51 // pred_check
        %p923 = pneg %p243
      $region58: #{tpu_custom_call.1} parent=51 // pred_check_branch
        %925 = sbr.rel (%p923) target = $region60
      $region59: #{tpu_custom_call.1} parent=51 // pred_region
        %s926 = smul.u32 4, %s21
      $region60: #{tpu_custom_call.1} parent=51 // pred_fallthru
        _
    $region52: #{tpu_custom_call.1} parent=5 // pred_fallthru
      _
    %p927 = scmp.le.s32.totalorder 2, %s16
    // Predicated region
    $region61: #{tpu_custom_call.1} parent=5 // pred_check
      %p928 = pneg %p927
    $region62: #{tpu_custom_call.1} parent=5 // pred_check_branch
      %930 = sbr.rel (%p928) target = $region64
    $region63: #{tpu_custom_call.1} parent=5 // pred_region
      %s931 = ssub.s32 %s16, 2
      // Predicated region
      $region65: #{tpu_custom_call.1} parent=63 // pred_check
        %p932 = pneg %p223
      $region66: #{tpu_custom_call.1} parent=63 // pred_check_branch
        %934 = sbr.rel (%p932) target = $region68
      $region67: #{tpu_custom_call.1} parent=63 // pred_region
        %s935 = smul.u32 4, %s22
        %p936 = scmp.lt.s32.totalorder %s935, 7
        %s937 = scalar_select %p936, %s935, 7
        %s938 = smul.addr %s937, 8
        %s939 = scalar_lea.vmem %s8, %s938
      $region68: #{tpu_custom_call.1} parent=63 // pred_fallthru
        _
      // Predicated region
      $region69: #{tpu_custom_call.1} parent=63 // pred_check
        %p940 = pneg %p249
      $region70: #{tpu_custom_call.1} parent=63 // pred_check_branch
        %942 = sbr.rel (%p940) target = $region72
      $region71: #{tpu_custom_call.1} parent=63 // pred_region
        %s943 = smul.u32 4, %s22
        %p944 = scmp.lt.s32.totalorder %s943, 7
        %s945 = scalar_select %p944, %s943, 7
        %s946 = smul.addr %s945, 8
        %s947 = scalar_lea.vmem %s9, %s946
      $region72: #{tpu_custom_call.1} parent=63 // pred_fallthru
        _
    $region64: #{tpu_custom_call.1} parent=5 // pred_fallthru
      _
  $region6: #{tpu_custom_call.1} parent=0 // loop_footer
    %s20 = sadd.s32 1, %s16
  $region7: #{tpu_custom_call.1} parent=0 // loop_footer_branch
    %15 = sbr.rel target = $region3
  $region8: #{tpu_custom_call.1} parent=0 // loop_exit
    _

</llo_original>
